<compile_context>
chip_gen: v6e
topology: v6e:2x2x1
jax: 0.10.0
libtpu: 0.0.40
codegen_flags: <defaults>
</compile_context>

<pallas_src>
import jax
import jax.numpy as jnp
from jax.experimental import pallas as pl
from jax.experimental.pallas import tpu as pltpu


def _downsample_add_kernel(feat_ref, w_ref, shift_ref, x_ref, o_ref):
    # feat_ref:    [1, C_in, TS]   one batch element, one spatial tile
    # w_ref:       [C_out, C_in]   conv weight with BN scale folded in (resident)
    # shift_ref:   [C_out, 1]      folded BatchNorm shift, f32 (resident)
    # x_ref/o_ref: [1, C_out, TS]  residual stream tile / output tile
    y = jnp.dot(w_ref[...], feat_ref[0],
                preferred_element_type=jnp.float32)        # [C_out, TS] f32 acc
    y = y + shift_ref[...]                                 # per-channel BN shift
    o_ref[0] = (x_ref[0].astype(jnp.float32) + y).astype(o_ref.dtype)


def _pick_spatial_tile(s, c_in, c_out, feat_itemsize, x_itemsize):
    """Largest lane-dense (multiple of 128) spatial tile whose double-buffered
    working set stays well under the smallest VMEM (64 MiB on v7x)."""
    budget = 24 * 1024 * 1024                               # pipelined-tile budget
    per_col = 2 * (c_in * max(feat_itemsize, 4)             # 2x = double buffering
                   + 2 * c_out * max(x_itemsize, 4))        # x tile + out tile
    ts = budget // max(per_col, 1)
    ts = max(128, min(ts, 4096))
    ts = (ts // 128) * 128
    return s if s <= ts else ts


def downsample_add(x, feat, conv_w, bn_gamma, bn_beta, bn_mean, bn_var,
                   *, stride=2, eps=1e-5):
    """x: [N, C_out, Ho, Wo] (NCHW), feat: [N, C_in, H, W] (NCHW).
    Returns x + BatchNorm(Conv1x1_stride(feat)), NCHW, dtype of x."""
    N, C_out, Ho, Wo = x.shape
    _, C_in, H, W = feat.shape
    assert Ho == -(-H // stride) and Wo == -(-W // stride)
    S = Ho * Wo

    # --- glue (plain JAX): NCHW kept throughout, only reshapes / one slice ---
    # TODO(synk): fold the stride-2 spatial subsample into the feat DMA (manual
    # strided copy with memory_space=pl.ANY) instead of this XLA slice.
    feat_s = feat[:, :, ::stride, ::stride].reshape(N, C_in, S)   # [N, C_in, S]
    x_flat = x.reshape(N, C_out, S)                               # [N, C_out, S]

    # Fold eval-mode BatchNorm into the conv weight (scale) and a per-channel
    # shift: BN(W @ f) = (scale * W) @ f + shift.
    scale = (bn_gamma.astype(jnp.float32)
             / jnp.sqrt(bn_var.astype(jnp.float32) + eps))        # [C_out]
    shift = (bn_beta.astype(jnp.float32)
             - bn_mean.astype(jnp.float32) * scale)               # [C_out]
    w = (conv_w[:, :, 0, 0].astype(jnp.float32)
         * scale[:, None]).astype(feat.dtype)                     # [C_out, C_in]
    shift = shift.reshape(C_out, 1)

    TS = _pick_spatial_tile(S, C_in, C_out,
                            jnp.dtype(feat.dtype).itemsize,
                            jnp.dtype(x.dtype).itemsize)
    grid = (N, pl.cdiv(S, TS))

    out_flat = pl.pallas_call(
        _downsample_add_kernel,
        out_shape=jax.ShapeDtypeStruct((N, C_out, S), x.dtype),
        grid=grid,
        in_specs=[
            pl.BlockSpec((1, C_in, TS), lambda n, s: (n, 0, s)),    # feat tile
            pl.BlockSpec((C_out, C_in), lambda n, s: (0, 0)),       # folded W (resident)
            pl.BlockSpec((C_out, 1), lambda n, s: (0, 0)),          # bn shift (resident)
            pl.BlockSpec((1, C_out, TS), lambda n, s: (n, 0, s)),   # residual x tile
        ],
        out_specs=pl.BlockSpec((1, C_out, TS), lambda n, s: (n, 0, s)),
        input_output_aliases={3: 0},   # reuse x's HBM buffer for the output
        compiler_params=pltpu.CompilerParams(
            dimension_semantics=("parallel", "parallel"),
            vmem_limit_bytes=48 * 1024 * 1024),
    )(feat_s, w, shift, x_flat)

    return out_flat.reshape(N, C_out, Ho, Wo)


if __name__ == "__main__":
    key = jax.random.PRNGKey(0)
    k_x, k_f, k_w, k_g, k_b, k_m, k_v = jax.random.split(key, 7)

    # Small shapes consistent with the module:
    #   feat: [N=2, C_in=4, H=16, W=16]  (input to the downsample branch)
    #   downsample = Conv2d(4, 8, kernel_size=1, stride=2, bias=False) + BN(8)
    #   x:    [N=2, C_out=8, Ho=8, Wo=8] (residual stream the identity is added to)
    N, C_in, H, W = 2, 4, 16, 16
    C_out, stride = 8, 2
    Ho, Wo = H // stride, W // stride

    feat = jax.random.normal(k_f, (N, C_in, H, W), dtype=jnp.float32)
    x = jax.random.normal(k_x, (N, C_out, Ho, Wo), dtype=jnp.float32)

    conv_w = jax.random.normal(k_w, (C_out, C_in, 1, 1), dtype=jnp.float32) * 0.1
    bn_gamma = 1.0 + 0.1 * jax.random.normal(k_g, (C_out,), dtype=jnp.float32)
    bn_beta = 0.1 * jax.random.normal(k_b, (C_out,), dtype=jnp.float32)
    bn_mean = 0.1 * jax.random.normal(k_m, (C_out,), dtype=jnp.float32)
    bn_var = jnp.abs(jax.random.normal(k_v, (C_out,), dtype=jnp.float32)) + 0.5

    out = downsample_add(x, feat, conv_w, bn_gamma, bn_beta, bn_mean, bn_var,
                         stride=stride)
    out = jax.block_until_ready(out)

    # Pure-JAX reference check of the same math.
    eps = 1e-5
    feat_s = feat[:, :, ::stride, ::stride]
    conv_ref = jnp.einsum("nchw,oc->nohw", feat_s, conv_w[:, :, 0, 0])
    bn_ref = (conv_ref - bn_mean[None, :, None, None]) / jnp.sqrt(
        bn_var[None, :, None, None] + eps) * bn_gamma[None, :, None, None] \
        + bn_beta[None, :, None, None]
    ref = x + bn_ref
    assert jnp.allclose(out, ref, atol=1e-4, rtol=1e-4), "mismatch vs reference"

    print("KERNEL_OK")
</pallas_src>

<mosaic_0001>
module attributes {stable_mosaic.version = 11 : i64} {
  func.func @_downsample_add_kernel(%arg0: i32, %arg1: i32, %arg2: memref<1x4x64xf32, #tpu.memory_space<vmem>>, %arg3: memref<8x4xf32, #tpu.memory_space<vmem>>, %arg4: memref<8x1xf32, #tpu.memory_space<vmem>>, %arg5: memref<1x8x64xf32, #tpu.memory_space<vmem>>, %arg6: memref<1x8x64xf32, #tpu.memory_space<vmem>>) attributes {dimension_semantics = [#tpu.dimension_semantics<parallel>, #tpu.dimension_semantics<parallel>], iteration_bounds = array<i64: 2, 1>, scalar_prefetch = 0 : i64, scratch_operands = 0 : i64, tpu.core_type = #tpu.core_type<tc>, window_params = [{transform_indices = @transform_0, window_bounds = array<i64: 1, 4, 64>}, {pipeline_mode = #tpu.pipeline_mode<synchronous>, transform_indices = @transform_1, window_bounds = array<i64: 8, 4>}, {pipeline_mode = #tpu.pipeline_mode<synchronous>, transform_indices = @transform_2, window_bounds = array<i64: 8, 1>}, {transform_indices = @transform_3, window_bounds = array<i64: 1, 8, 64>}, {transform_indices = @transform_4, window_bounds = array<i64: 1, 8, 64>}]} {
    %c0 = arith.constant 0 : index
    %c0_0 = arith.constant 0 : index
    %0 = vector.load %arg3[%c0, %c0_0] : memref<8x4xf32, #tpu.memory_space<vmem>>, vector<8x4xf32>
    %c0_1 = arith.constant 0 : index
    %c0_2 = arith.constant 0 : index
    %c0_3 = arith.constant 0 : index
    %1 = vector.load %arg2[%c0_1, %c0_2, %c0_3] : memref<1x4x64xf32, #tpu.memory_space<vmem>>, vector<1x4x64xf32>
    %2 = vector.shape_cast %1 : vector<1x4x64xf32> to vector<4x64xf32>
    %cst = arith.constant dense<0.000000e+00> : vector<8x64xf32>
    %3 = tpu.matmul %0, %2, %cst {dimension_numbers = #tpu.dot_dimension_numbers<[1], [0], [0], [1], [0, 0, 1, 1], [], []>} : vector<8x4xf32>, vector<4x64xf32>, vector<8x64xf32> -> vector<8x64xf32>
    %c0_4 = arith.constant 0 : index
    %c0_5 = arith.constant 0 : index
    %4 = vector.load %arg4[%c0_4, %c0_5] : memref<8x1xf32, #tpu.memory_space<vmem>>, vector<8x1xf32>
    %5 = vector.broadcast %4 : vector<8x1xf32> to vector<8x64xf32>
    %6 = arith.addf %3, %5 : vector<8x64xf32>
    %c0_6 = arith.constant 0 : index
    %c0_7 = arith.constant 0 : index
    %c0_8 = arith.constant 0 : index
    %7 = vector.load %arg5[%c0_6, %c0_7, %c0_8] : memref<1x8x64xf32, #tpu.memory_space<vmem>>, vector<1x8x64xf32>
    %8 = vector.shape_cast %7 : vector<1x8x64xf32> to vector<8x64xf32>
    %9 = arith.addf %8, %6 : vector<8x64xf32>
    %c0_9 = arith.constant 0 : index
    %c0_10 = arith.constant 0 : index
    %c0_11 = arith.constant 0 : index
    %10 = vector.load %arg6[%c0_9, %c0_10, %c0_11] : memref<1x8x64xf32, #tpu.memory_space<vmem>>, vector<1x8x64xf32>
    %11 = vector.shape_cast %10 : vector<1x8x64xf32> to vector<8x64xf32>
    %12 = vector.shape_cast %9 : vector<8x64xf32> to vector<1x8x64xf32>
    tpu.vector_store %arg6[%c0_9, %c0_10, %c0_11], %12 {strides = array<i32>} : memref<1x8x64xf32, #tpu.memory_space<vmem>>, vector<1x8x64xf32>,
    return
  }
  func.func @transform_0(%arg0: i32, %arg1: i32) -> (i32, i32, i32) {
    %c0_i32 = arith.constant 0 : i32
    %c0_i32_0 = arith.constant 0 : i32
    return %arg0, %c0_i32, %arg1 : i32, i32, i32
  }
  func.func @transform_1(%arg0: i32, %arg1: i32) -> (i32, i32) {
    %c0_i32 = arith.constant 0 : i32
    %c0_i32_0 = arith.constant 0 : i32
    %c0_i32_1 = arith.constant 0 : i32
    return %c0_i32, %c0_i32_0 : i32, i32
  }
  func.func @transform_2(%arg0: i32, %arg1: i32) -> (i32, i32) {
    %c0_i32 = arith.constant 0 : i32
    %c0_i32_0 = arith.constant 0 : i32
    %c0_i32_1 = arith.constant 0 : i32
    return %c0_i32, %c0_i32_0 : i32, i32
  }
  func.func @transform_3(%arg0: i32, %arg1: i32) -> (i32, i32, i32) {
    %c0_i32 = arith.constant 0 : i32
    %c0_i32_0 = arith.constant 0 : i32
    return %arg0, %c0_i32, %arg1 : i32, i32, i32
  }
  func.func @transform_4(%arg0: i32, %arg1: i32) -> (i32, i32, i32) {
    %c0_i32 = arith.constant 0 : i32
    %c0_i32_0 = arith.constant 0 : i32
    return %arg0, %c0_i32, %arg1 : i32, i32, i32
  }
}

</mosaic_0001>

<llo_original>
// kernel: tpu_custom_call.1
$region0: #{tpu_custom_call.1}
  #allocation0 [shape = 'u32[]', space=smem, size = 0x4, offset = 0x4, fixed_abs, tag = 'smem constant byte address 0x4 - core index']
  #allocation1 [shape = 'u32[144,128]{1,0:T(1,128)}', space=vmem, size = 0x12000, scoped, tag = 'internal scratch']
  %s0 = inlined_call_operand.vmem [shape: f32[2,4,64], index: 0, kind: input, shape index: {}]
  %s1 = inlined_call_operand.vmem [shape: f32[8,4], index: 1, kind: input, shape index: {}]
  %s2 = inlined_call_operand.vmem [shape: f32[8,1], index: 2, kind: input, shape index: {}]
  %s3 = inlined_call_operand.hbm [shape: f32[2,8,64], index: 3, kind: input, shape index: {}, may-alias: {3,4}]
  %s4 = inlined_call_operand.hbm [shape: f32[2,8,64], index: 4, kind: output, shape index: {}, may-alias: {3,4}]
  %s5 = sld [smem:[#allocation0]]
  $region53: #{tpu_custom_call.1} parent=0
    _
  %s7 = ssub.s32 1, %s5
  %s8 = scalar_select 0, %s7, %s5
  $region1: #{tpu_custom_call.1} parent=0
    #allocation2 [shape = 'u8[8192]{0}', space=vmem, size = 0x2000, scoped, tag = 'input window, operand 3']
    #allocation3 [shape = 's32[2]{0}', space=sflag, size = 0x8, scoped, tag = 'scoped memory for tpu_custom_call.1']
    #allocation4 [shape = 's32[2]{0}', space=sflag, size = 0x8, scoped, tag = 'scoped memory for tpu_custom_call.1']
    #allocation5 [shape = 'u8[8192]{0}', space=vmem, size = 0x2000, scoped, tag = 'output window, operand 0']
    %9 = vsyncpa [#allocation3], 0
    %s10 = scalar_lea.sflag [#allocation3], 1
    %11 = vsyncpa %s10, 0
    %12 = vsyncpa [#allocation4], 0
    %s13 = scalar_lea.sflag [#allocation4], 1
    %14 = vsyncpa %s13, 0
    loop: start=0, step=1, limit=4
    $region2: #{tpu_custom_call.1} parent=1 // loop_pre_header
      _
    $region3: #{tpu_custom_call.1} parent=1 // loop_header
      %s16 = sphi 0, %s20
      %p17 = scmp.ge.s32.totalorder %s16, 4
      %s23 = sphi 0, %s35
      %s24 = sphi 0, %s31
      %s25 = sphi 0, %s23
      %s26 = sphi 0, %s24
      %s27 = sphi 0, %s25
      %s28 = sphi 0, %s26
      %s40 = sphi 0, %s42
      %s43 = sphi 0, %s40
      %s44 = sphi 0, %s43
      %s60 = sphi 0, %s44
      %s64 = sphi 0, %s64
      %s66 = sphi 0, %s64
      %s67 = sphi 0, %s66
      %s81 = sphi 0, %s67
      %s85 = sphi 0, %s85
      %s87 = sphi 0, %s85
      %s88 = sphi 0, %s87
      %s102 = sphi 0, %s88
      %s110 = sphi 0, %s112
      %s113 = sphi 0, %s110
      %s114 = sphi 0, %s113
      %s130 = sphi 0, %s114
      %s138 = sphi 0, %s140
      %s141 = sphi 0, %s138
      %s142 = sphi 0, %s141
      %s158 = sphi 0, %s142
    $region4: #{tpu_custom_call.1} parent=1 // loop_header_branch
      %19 = sbr.rel (%p17) target = $region8
    $region5: #{tpu_custom_call.1} parent=1 // loop_body
      %s21 = ssub.s32 %s16, 1
      %s22 = ssub.s32 %s16, 2
      %s29 = sadd.s32 1, %s24
      %p30 = scmp.ge.s32.totalorder %s29, 1
      %s31 = scalar_select %p30, 0, %s29
      %s32 = sadd.s32 1, %s23
      %s33 = scalar_select %p30, %s32, %s23
      %p34 = scmp.ge.s32.totalorder %s33, 2
      %s35 = scalar_select %p34, 0, %s33
      %s36 = ssub.s32 %s23, %s35
      %s37 = ssub.s32 %s24, %s31
      %s38 = sor.u32 %s36, %s37
      %p39 = scmp.eq.s32.totalorder %s38, 0
      %s41 = sadd.s32 %s40, 1
      %s42 = scalar_select %p39, %s40, %s41
      %p45 = pneg %p39
      %p46 = scmp.eq.s32.totalorder %s16, 1
      %p47 = por %p45, %p46
      %p48 = scmp.ne.s32.totalorder %s40, %s43
      %p49 = scmp.eq.s32.totalorder %s16, 0
      %p50 = por %p48, %p49
      %p51 = scmp.ne.s32.totalorder %s40, %s43
      %p52 = scmp.eq.s32.totalorder %s21, 1
      %p53 = por %p51, %p52
      %p54 = scmp.ne.s32.totalorder %s43, %s44
      %p55 = scmp.eq.s32.totalorder %s21, 0
      %p56 = por %p54, %p55
      %p57 = scmp.ne.s32.totalorder %s43, %s44
      %p58 = scmp.eq.s32.totalorder %s22, 1
      %p59 = por %p57, %p58
      %p61 = scmp.ne.s32.totalorder %s44, %s60
      %p62 = scmp.eq.s32.totalorder %s22, 0
      %p63 = por %p61, %p62
      %s65 = sadd.s32 %s64, 1
      %p68 = scmp.eq.s32.totalorder %s16, 1
      %p69 = scmp.ne.s32.totalorder %s64, %s66
      %p70 = scmp.eq.s32.totalorder %s16, 0
      %p71 = por %p69, %p70
      %p72 = scmp.ne.s32.totalorder %s64, %s66
      %p73 = scmp.eq.s32.totalorder %s21, 1
      %p74 = por %p72, %p73
      %p75 = scmp.ne.s32.totalorder %s66, %s67
      %p76 = scmp.eq.s32.totalorder %s21, 0
      %p77 = por %p75, %p76
      %p78 = scmp.ne.s32.totalorder %s66, %s67
      %p79 = scmp.eq.s32.totalorder %s22, 1
      %p80 = por %p78, %p79
      %p82 = scmp.ne.s32.totalorder %s67, %s81
      %p83 = scmp.eq.s32.totalorder %s22, 0
      %p84 = por %p82, %p83
      %s86 = sadd.s32 %s85, 1
      %p89 = scmp.eq.s32.totalorder %s16, 1
      %p90 = scmp.ne.s32.totalorder %s85, %s87
      %p91 = scmp.eq.s32.totalorder %s16, 0
      %p92 = por %p90, %p91
      %p93 = scmp.ne.s32.totalorder %s85, %s87
      %p94 = scmp.eq.s32.totalorder %s21, 1
      %p95 = por %p93, %p94
      %p96 = scmp.ne.s32.totalorder %s87, %s88
      %p97 = scmp.eq.s32.totalorder %s21, 0
      %p98 = por %p96, %p97
      %p99 = scmp.ne.s32.totalorder %s87, %s88
      %p100 = scmp.eq.s32.totalorder %s22, 1
      %p101 = por %p99, %p100
      %p103 = scmp.ne.s32.totalorder %s88, %s102
      %p104 = scmp.eq.s32.totalorder %s22, 0
      %p105 = por %p103, %p104
      %s106 = ssub.s32 %s23, %s35
      %s107 = ssub.s32 %s24, %s31
      %s108 = sor.u32 %s106, %s107
      %p109 = scmp.eq.s32.totalorder %s108, 0
      %s111 = sadd.s32 %s110, 1
      %s112 = scalar_select %p109, %s110, %s111
      %p115 = pneg %p109
      %p116 = scmp.eq.s32.totalorder %s16, 1
      %p117 = por %p115, %p116
      %p118 = scmp.ne.s32.totalorder %s110, %s113
      %p119 = scmp.eq.s32.totalorder %s16, 0
      %p120 = por %p118, %p119
      %p121 = scmp.ne.s32.totalorder %s110, %s113
      %p122 = scmp.eq.s32.totalorder %s21, 1
      %p123 = por %p121, %p122
      %p124 = scmp.ne.s32.totalorder %s113, %s114
      %p125 = scmp.eq.s32.totalorder %s21, 0
      %p126 = por %p124, %p125
      %p127 = scmp.ne.s32.totalorder %s113, %s114
      %p128 = scmp.eq.s32.totalorder %s22, 1
      %p129 = por %p127, %p128
      %p131 = scmp.ne.s32.totalorder %s114, %s130
      %p132 = scmp.eq.s32.totalorder %s22, 0
      %p133 = por %p131, %p132
      %s134 = ssub.s32 %s23, %s35
      %s135 = ssub.s32 %s24, %s31
      %s136 = sor.u32 %s134, %s135
      %p137 = scmp.eq.s32.totalorder %s136, 0
      %s139 = sadd.s32 %s138, 1
      %s140 = scalar_select %p137, %s138, %s139
      %p143 = pneg %p137
      %p144 = scmp.eq.s32.totalorder %s16, 1
      %p145 = por %p143, %p144
      %p146 = scmp.ne.s32.totalorder %s138, %s141
      %p147 = scmp.eq.s32.totalorder %s16, 0
      %p148 = por %p146, %p147
      %p149 = scmp.ne.s32.totalorder %s138, %s141
      %p150 = scmp.eq.s32.totalorder %s21, 1
      %p151 = por %p149, %p150
      %p152 = scmp.ne.s32.totalorder %s141, %s142
      %p153 = scmp.eq.s32.totalorder %s21, 0
      %p154 = por %p152, %p153
      %p155 = scmp.ne.s32.totalorder %s141, %s142
      %p156 = scmp.eq.s32.totalorder %s22, 1
      %p157 = por %p155, %p156
      %p159 = scmp.ne.s32.totalorder %s142, %s158
      %p160 = scmp.eq.s32.totalorder %s22, 0
      %p161 = por %p159, %p160
      %p162 = scmp.le.s32.totalorder 1, %s16
      %p163 = scmp.lt.s32.totalorder %s16, 3
      %p164 = pnand %p162, %p163
      %p165 = pneg %p164
      // Predicated region
      $region9: #{tpu_custom_call.1} parent=5 // pred_check
        _
      $region10: #{tpu_custom_call.1} parent=5 // pred_check_branch
        %167 = sbr.rel (%p164) target = $region12
      $region11: #{tpu_custom_call.1} parent=5 // pred_region
        %s168 = ssub.s32 %s16, 1
        // Predicated region
        $region13: #{tpu_custom_call.1} parent=11 // pred_check
          %p169 = pneg %p77
        $region14: #{tpu_custom_call.1} parent=11 // pred_check_branch
          %171 = sbr.rel (%p169) target = $region16
        $region15: #{tpu_custom_call.1} parent=11 // pred_region
          _
        $region16: #{tpu_custom_call.1} parent=11 // pred_fallthru
          _
        // Predicated region
        $region17: #{tpu_custom_call.1} parent=11 // pred_check
          %p172 = pneg %p98
        $region18: #{tpu_custom_call.1} parent=11 // pred_check_branch
          %174 = sbr.rel (%p172) target = $region20
        $region19: #{tpu_custom_call.1} parent=11 // pred_region
          _
        $region20: #{tpu_custom_call.1} parent=11 // pred_fallthru
          _
      $region12: #{tpu_custom_call.1} parent=5 // pred_fallthru
        _
      %p175 = scmp.lt.s32.totalorder %s16, 2
      // Predicated region
      $region21: #{tpu_custom_call.1} parent=5 // pred_check
        %p176 = pneg %p175
      $region22: #{tpu_custom_call.1} parent=5 // pred_check_branch
        %178 = sbr.rel (%p176) target = $region24
      $region23: #{tpu_custom_call.1} parent=5 // pred_region
        // Predicated region
        $region25: #{tpu_custom_call.1} parent=23 // pred_check
          %p179 = pneg %p50
        $region26: #{tpu_custom_call.1} parent=23 // pred_check_branch
          %181 = sbr.rel (%p179) target = $region28
        $region27: #{tpu_custom_call.1} parent=23 // pred_region
          %p182 = scmp.lt.s32.totalorder %s23, 1
          %s183 = scalar_select %p182, %s23, 1
          %p184 = scmp.lt.s32.totalorder %s24, 0
          %s185 = scalar_select %p184, %s24, 0
          %s186 = sadd.s32 %s185, %s183
          %s187 = smul.addr %s186, 4
          %s188 = scalar_lea.vmem %s0, %s187
        $region28: #{tpu_custom_call.1} parent=23 // pred_fallthru
          _
        // Predicated region
        $region29: #{tpu_custom_call.1} parent=23 // pred_check
          %p189 = pneg %p120
        $region30: #{tpu_custom_call.1} parent=23 // pred_check_branch
          %191 = sbr.rel (%p189) target = $region32
        $region31: #{tpu_custom_call.1} parent=23 // pred_region
          %s192 = sand.u32 %s110, 1
          %s193 = scalar_lea.sflag [#allocation3], %s192
          %s194 = sand.u32 %s110, 1
          %s195 = smul.addr %s194, 8
          %s196 = scalar_lea.vmem [#allocation2], %s195
          %s198 = ssub.s32 128, 128
          %199 = vsyncadd %s193, %s198
          %s200 = sadd.s32 %s24, %s23
          %s201 = smul.addr %s200, 128
          %s202 = scalar_lea.hbm %s3, %s201
          %s204 = sshll.u32 %s196, 4
          %s205 = int_to_ptr.vmem [resolvable:$true] %s204
          %207 = dma.hbm_to_vmem [thread:$0]  %s202, 128, %s205, %s193
        $region32: #{tpu_custom_call.1} parent=23 // pred_fallthru
          _
      $region24: #{tpu_custom_call.1} parent=5 // pred_fallthru
        _
      %p208 = scmp.le.s32.totalorder 1, %s16
      %p209 = scmp.lt.s32.totalorder %s16, 3
      %p210 = pnand %p208, %p209
      %p211 = pneg %p210
      // Predicated region
      $region33: #{tpu_custom_call.1} parent=5 // pred_check
        _
      $region34: #{tpu_custom_call.1} parent=5 // pred_check_branch
        %213 = sbr.rel (%p210) target = $region36
      $region35: #{tpu_custom_call.1} parent=5 // pred_region
        %s214 = ssub.s32 %s16, 1
        %s215 = sand.u32 %s113, 1
        %s216 = scalar_lea.sflag [#allocation3], %s215
        %s217 = sand.u32 %s113, 1
        %s218 = smul.addr %s217, 8
        %s219 = scalar_lea.vmem [#allocation2], %s218
        // Predicated region
        $region37: #{tpu_custom_call.1} parent=35 // pred_check
          %p220 = pneg %p126
        $region38: #{tpu_custom_call.1} parent=35 // pred_check_branch
          %222 = sbr.rel (%p220) target = $region40
        $region39: #{tpu_custom_call.1} parent=35 // pred_region
          %223 = dma.done %s216, 128
        $region40: #{tpu_custom_call.1} parent=35 // pred_fallthru
          _
        %p224 = scmp.lt.s32.totalorder %s25, 1
        %s225 = scalar_select %p224, %s25, 1
        %p226 = scmp.lt.s32.totalorder %s26, 0
        %s227 = scalar_select %p226, %s26, 0
        %s228 = sadd.s32 %s227, %s225
        %s229 = smul.addr %s228, 4
        %s230 = scalar_lea.vmem %s0, %s229
        %p231 = pneg %p56
        %p232 = pneg %p53
        %p233 = pneg %p77
        %p234 = pneg %p74
        %p235 = pneg %p98
        %p236 = pneg %p95
        %s237 = sand.u32 %s113, 1
        %s238 = scalar_lea.sflag [#allocation3], %s237
        %s239 = sand.u32 %s113, 1
        %s240 = smul.addr %s239, 8
        %s241 = scalar_lea.vmem [#allocation2], %s240
        %p242 = pneg %p126
        %p243 = pneg %p123
        %p244 = pneg %p154
        %p245 = pneg %p151
        %s246 = sand.u32 %s141, 1
        %s247 = scalar_lea.sflag [#allocation4], %s246
        %s248 = sand.u32 %s141, 1
        %s249 = smul.addr %s248, 8
        %s250 = scalar_lea.vmem [#allocation5], %s249
        %p251 = scmp.lt.s32.totalorder %s25, 1
        %s252 = scalar_select %p251, %s25, 1
        %p253 = scmp.lt.s32.totalorder %s26, 0
        %s254 = scalar_select %p253, %s26, 0
        %s255 = sadd.s32 %s254, %s252
        %s256 = smul.addr %s255, 4
        %s257 = scalar_lea.vmem %s0, %s256
        %v258 = vld [vmem:[%s1] sm:$0xff]
        %v259 = vld [vmem:[%s257] sm:$0xf]
        %v260 = vld [vmem:[%s2] sm:$0xff]
        %262 = vset.pattern.permute.xlu0 0
        %263 = vperm.xlu0 %262, %v260
        %v264 = vpop.permute.xlu0 %263
        %vm266 = vcmask 31744
        %v268 = vsel %vm266, %v258, 0
        %vm270 = vcmask 1043456
        %v272 = vsel %vm270, %v259, 0
        %274 = vmatprep.subr.mxu0 0.0
        %275 = vmatpush1.msra.mxu0 0.0
        %276 = vmatprep.subr.mxu0 0.0
        %277 = vmatpush1.msra.mxu0 0.0
        %278 = vmatprep.subr.mxu0 0.0
        %279 = vmatpush1.msra.mxu0 0.0
        %280 = vmatprep.subr.mxu0 0.0
        %281 = vmatpush1.msra.mxu0 0.0
        %282 = vmatprep.subr.mxu0 0.0
        %283 = vmatpush1.msra.mxu0 0.0
        %284 = vmatprep.subr.mxu0 0.0
        %285 = vmatpush1.msra.mxu0 0.0
        %286 = vmatprep.subr.mxu0 0.0
        %287 = vmatpush1.msra.mxu0 0.0
        %288 = vmatprep.subr.mxu0 0.0
        %289 = vmatpush1.msra.mxu0 0.0
        %290 = vmatprep.subr.mxu0 0.0
        %291 = vmatpush1.msra.mxu0 0.0
        %292 = vmatprep.subr.mxu0 0.0
        %293 = vmatpush1.msra.mxu0 0.0
        %294 = vmatprep.subr.mxu0 0.0
        %295 = vmatpush1.msra.mxu0 0.0
        %296 = vmatprep.subr.mxu0 0.0
        %297 = vmatpush1.msra.mxu0 0.0
        %298 = vmatprep.subr.mxu0 0.0
        %299 = vmatpush1.msra.mxu0 0.0
        %300 = vmatprep.subr.mxu0 0.0
        %301 = vmatpush1.msra.mxu0 0.0
        %302 = vmatprep.subr.mxu0 0.0
        %303 = vmatpush1.msra.mxu0 0.0
        %304 = vmatprep.subr.mxu0 0.0
        %305 = vmatpush1.msra.mxu0 %v272
        %306 = vmatprep.subr.mxu0 0.0
        %307 = vmatpush2.msra.mxu0 0.0
        %308 = vmatprep.subr.mxu0 0.0
        %309 = vmatpush2.msra.mxu0 0.0
        %310 = vmatprep.subr.mxu0 0.0
        %311 = vmatpush2.msra.mxu0 0.0
        %312 = vmatprep.subr.mxu0 0.0
        %313 = vmatpush2.msra.mxu0 0.0
        %314 = vmatprep.subr.mxu0 0.0
        %315 = vmatpush2.msra.mxu0 0.0
        %316 = vmatprep.subr.mxu0 0.0
        %317 = vmatpush2.msra.mxu0 0.0
        %318 = vmatprep.subr.mxu0 0.0
        %319 = vmatpush2.msra.mxu0 0.0
        %320 = vmatprep.subr.mxu0 0.0
        %321 = vmatpush2.msra.mxu0 0.0
        %322 = vmatprep.subr.mxu0 0.0
        %323 = vmatpush2.msra.mxu0 0.0
        %324 = vmatprep.subr.mxu0 0.0
        %325 = vmatpush2.msra.mxu0 0.0
        %326 = vmatprep.subr.mxu0 0.0
        %327 = vmatpush2.msra.mxu0 0.0
        %328 = vmatprep.subr.mxu0 0.0
        %329 = vmatpush2.msra.mxu0 0.0
        %330 = vmatprep.subr.mxu0 0.0
        %331 = vmatpush2.msra.mxu0 0.0
        %332 = vmatprep.subr.mxu0 0.0
        %333 = vmatpush2.msra.mxu0 0.0
        %334 = vmatprep.subr.mxu0 0.0
        %335 = vmatpush2.msra.mxu0 0.0
        %336 = vmatprep.subr.mxu0 0.0
        %337 = vmatpush2.msra.mxu0 0.0
        %338 = vmatprep.mubr.f32.mxu0 0.0
        %339 = vmatmul.mubr.f32.gmra.mxu0 %v268
        %v340 = vpop.f32.mrf.mxu0
        %v341 = vadd.f32 %v264, %v340
        %v342 = vpop.f32.mrf.mxu0
        %343 = vdwg.mxu0
        %v344 = vld [vmem:[%s219] sm:$0xff]
        %v345 = vadd.f32 %v344, %v341
        %vm346 = vcmask 523264
        %347 = vst.msk [vmem:[%s250] sm:$0xff] %vm346, %v345
        %s348 = sand.u32 %s141, 1
        %s349 = scalar_lea.sflag [#allocation4], %s348
        %s350 = sand.u32 %s141, 1
        %s351 = smul.addr %s350, 8
        %s352 = scalar_lea.vmem [#allocation5], %s351
        // Predicated region
        $region41: #{tpu_custom_call.1} parent=35 // pred_check
          %p353 = pneg %p151
        $region42: #{tpu_custom_call.1} parent=35 // pred_check_branch
          %355 = sbr.rel (%p353) target = $region44
        $region43: #{tpu_custom_call.1} parent=35 // pred_region
          %s357 = ssub.s32 128, 128
          %358 = vsyncadd %s349, %s357
          %s359 = sadd.s32 %s26, %s25
          %s360 = smul.addr %s359, 128
          %s361 = scalar_lea.hbm %s4, %s360
          %s363 = sshll.u32 %s352, 4
          %s364 = int_to_ptr.vmem [resolvable:$true] %s363
          %366 = dma.vmem_to_hbm [thread:$0]  %s364, 128, %s361, %s349
        $region44: #{tpu_custom_call.1} parent=35 // pred_fallthru
          _
      $region36: #{tpu_custom_call.1} parent=5 // pred_fallthru
        _
      %p367 = scmp.le.s32.totalorder 2, %s16
      // Predicated region
      $region45: #{tpu_custom_call.1} parent=5 // pred_check
        %p368 = pneg %p367
      $region46: #{tpu_custom_call.1} parent=5 // pred_check_branch
        %370 = sbr.rel (%p368) target = $region48
      $region47: #{tpu_custom_call.1} parent=5 // pred_region
        %s371 = ssub.s32 %s16, 2
        // Predicated region
        $region49: #{tpu_custom_call.1} parent=47 // pred_check
          %p372 = pneg %p157
        $region50: #{tpu_custom_call.1} parent=47 // pred_check_branch
          %374 = sbr.rel (%p372) target = $region52
        $region51: #{tpu_custom_call.1} parent=47 // pred_region
          %s375 = sand.u32 %s142, 1
          %s376 = scalar_lea.sflag [#allocation4], %s375
          %s377 = sand.u32 %s142, 1
          %s378 = smul.addr %s377, 8
          %s379 = scalar_lea.vmem [#allocation5], %s378
          %380 = dma.done %s376, 128
        $region52: #{tpu_custom_call.1} parent=47 // pred_fallthru
          _
      $region48: #{tpu_custom_call.1} parent=5 // pred_fallthru
        _
    $region6: #{tpu_custom_call.1} parent=1 // loop_footer
      %s20 = sadd.s32 1, %s16
    $region7: #{tpu_custom_call.1} parent=1 // loop_footer_branch
      %15 = sbr.rel target = $region3
    $region8: #{tpu_custom_call.1} parent=1 // loop_exit
      _
    %381 = vsyncpa [#allocation3], 1
    %s382 = scalar_lea.sflag [#allocation3], 1
    %383 = vsyncpa %s382, 1
    %384 = vsyncpa [#allocation4], 1
    %s385 = scalar_lea.sflag [#allocation4], 1
    %386 = vsyncpa %s385, 1

</llo_original>
